<compile_context>
chip_gen: v7x
topology: tpu7x:2x2x1
jax: 0.10.0
libtpu: 0.0.40
codegen_flags: <defaults>
</compile_context>

<pallas_src>
import functools

import jax
import jax.numpy as jnp
from jax.experimental import pallas as pl
from jax.experimental.pallas import tpu as pltpu

_LANE = 128
_SUBLANE = 8


def _round_up(x, m):
    return ((x + m - 1) // m) * m


def _chain_kernel(relu_flags, tap_after, x_ref, *refs):
    """Fused Linear(+ReLU) chain.

    refs = (w_0, b_0, w_1, b_1, ..., out_0, out_1, ...)
    relu_flags[i]   : apply ReLU after layer i
    tap_after[k]    : write k-th output after layer tap_after[k]
    Weights are already (in_pad, out_pad) so the MXU is fed directly (y = x @ W + b).
    Intermediates never leave VMEM.
    """
    n_layers = len(relu_flags)
    wb = refs[: 2 * n_layers]
    outs = refs[2 * n_layers:]

    h = x_ref[...].astype(jnp.float32)
    out_i = 0
    for li in range(n_layers):
        w = wb[2 * li][...]
        b = wb[2 * li + 1][...]
        h = jnp.dot(h, w, preferred_element_type=jnp.float32) + b
        if relu_flags[li]:
            h = jnp.maximum(h, 0.0)
        if out_i < len(tap_after) and tap_after[out_i] == li:
            outs[out_i][...] = h.astype(outs[out_i].dtype)
            out_i += 1


def _run_chain(x, layers_wb, relu_flags, tap_after, tap_true_dims, dtype=jnp.float32):
    """Run a fused padded Linear/ReLU chain; returns sliced (un-padded) outputs."""
    B, D = x.shape
    in_pad = layers_wb[0][0].shape[0]

    # Batch tile: multiple of 8 sublanes, capped so double-buffered tiles stay well
    # inside v7x's 64 MiB VMEM even for large feature dims.
    TB = min(512, _round_up(max(B, 1), _SUBLANE))
    B_pad = _round_up(B, TB)
    grid = (B_pad // TB,)

    # Zero-pad input (rows to B_pad, features to in_pad). Zero padding is exact:
    # padded weight rows/cols and padded bias lanes are zero, ReLU(0) = 0.
    x_p = jnp.zeros((B_pad, in_pad), dtype).at[:B, :D].set(x.astype(dtype))

    flat_wb = []
    in_specs = [pl.BlockSpec((TB, in_pad), lambda i: (i, 0))]
    for w, b in layers_wb:
        flat_wb += [w, b]
        # Constant block index -> weights/biases stay resident in VMEM across batch tiles.
        in_specs.append(pl.BlockSpec(w.shape, lambda i: (0, 0)))
        in_specs.append(pl.BlockSpec(b.shape, lambda i: (0, 0)))

    out_pads = [int(layers_wb[t][0].shape[1]) for t in tap_after]
    out_shape = tuple(jax.ShapeDtypeStruct((B_pad, p), dtype) for p in out_pads)
    out_specs = [pl.BlockSpec((TB, p), lambda i: (i, 0)) for p in out_pads]

    # Scheduler hints.
    flops = 2 * B_pad * sum(int(w.shape[0]) * int(w.shape[1]) for w, _ in layers_wb)
    param_bytes = 4 * sum(int(w.size) + int(b.size) for w, b in layers_wb)
    bytes_accessed = 4 * (int(x_p.size) + B_pad * sum(out_pads)) + param_bytes

    widest = max([in_pad] + [int(w.shape[1]) for w, _ in layers_wb])
    vmem_need = (param_bytes                      # resident weights/biases
                 + 2 * 4 * TB * in_pad            # double-buffered input tile
                 + 2 * 4 * TB * sum(out_pads)     # double-buffered output tiles
                 + 4 * 4 * TB * widest)           # live activations
    vmem_limit = int(min(max(2 * vmem_need, 4 << 20), 64 << 20))

    kernel = functools.partial(_chain_kernel, tuple(relu_flags), tuple(tap_after))

    outs = pl.pallas_call(
        kernel,
        out_shape=out_shape,
        grid_spec=pltpu.PrefetchScalarGridSpec(
            num_scalar_prefetch=0,
            grid=grid,
            in_specs=in_specs,
            out_specs=out_specs,
        ),
        compiler_params=pltpu.CompilerParams(
            dimension_semantics=("parallel",),
            vmem_limit_bytes=vmem_limit,
        ),
        cost_estimate=pl.CostEstimate(
            flops=flops, transcendentals=0, bytes_accessed=bytes_accessed),
    )(x_p, *flat_wb)

    if not isinstance(outs, (tuple, list)):
        outs = (outs,)
    return tuple(o[:B, :d] for o, d in zip(outs, tap_true_dims))


class NonLinearAutoencoderPallas:
    """JAX/Pallas port of the PyTorch NonLinearAutoencoder.

    Encoder: (Linear -> ReLU) x n_layers        (ReLU after every encoder layer)
    Decoder: (Linear -> ReLU) x (n_layers - 1), then final Linear (no activation)
    """

    # TODO(synk): return_activations=True (per-module forward-hook capture) is not
    # implemented; only the default (encoded, decoded) path is provided.

    def __init__(self, n_input, n_hidden_ls, n_layers, key, dtype=jnp.float32):
        assert len(n_hidden_ls) == n_layers
        self.n_input = n_input
        self.n_hidden_ls = list(n_hidden_ls)
        self.n_layers = n_layers
        self.dtype = dtype

        enc_dims = [n_input] + list(n_hidden_ls)
        rev = list(n_hidden_ls)[::-1]
        dec_dims = rev + [n_input]

        keys = jax.random.split(key, 2 * n_layers)

        def init_linear(k, fan_in, fan_out):
            kw, kb = jax.random.split(k)
            bound = 1.0 / (fan_in ** 0.5)  # PyTorch nn.Linear default init range
            w = jax.random.uniform(kw, (fan_out, fan_in), dtype, -bound, bound)
            b = jax.random.uniform(kb, (fan_out,), dtype, -bound, bound)
            return w, b

        def pad_transpose(w, b):
            fan_out, fan_in = w.shape
            ip, op = _round_up(fan_in, _LANE), _round_up(fan_out, _LANE)
            w_t = jnp.zeros((ip, op), dtype).at[:fan_in, :fan_out].set(w.T)
            b_p = jnp.zeros((1, op), dtype).at[0, :fan_out].set(b)
            return w_t, b_p

        self.encoder_raw, self.decoder_raw = [], []
        self.encoder_wb, self.decoder_wb = [], []
        for i in range(n_layers):
            w, b = init_linear(keys[i], enc_dims[i], enc_dims[i + 1])
            self.encoder_raw.append((w, b))
            self.encoder_wb.append(pad_transpose(w, b))
        for j in range(n_layers):
            w, b = init_linear(keys[n_layers + j], dec_dims[j], dec_dims[j + 1])
            self.decoder_raw.append((w, b))
            self.decoder_wb.append(pad_transpose(w, b))

    def __call__(self, x):
        n_enc, n_dec = len(self.encoder_wb), len(self.decoder_wb)
        layers = self.encoder_wb + self.decoder_wb
        relu_flags = [True] * n_enc + [True] * (n_dec - 1) + [False]
        tap_after = (n_enc - 1, n_enc + n_dec - 1)
        tap_true_dims = (self.n_hidden_ls[-1], self.n_input)
        encoded, decoded = _run_chain(
            x, layers, relu_flags, tap_after, tap_true_dims, self.dtype)
        return encoded, decoded

    def encode(self, x):
        n_enc = len(self.encoder_wb)
        (encoded,) = _run_chain(
            x, self.encoder_wb, [True] * n_enc, (n_enc - 1,),
            (self.n_hidden_ls[-1],), self.dtype)
        return encoded

    def decode(self, x):
        n_dec = len(self.decoder_wb)
        (decoded,) = _run_chain(
            x, self.decoder_wb, [True] * (n_dec - 1) + [False], (n_dec - 1,),
            (self.n_input,), self.dtype)
        return decoded

    def get_hyperparams(self):
        return {
            "n_input": self.n_input,
            "n_hidden_ls": self.n_hidden_ls,
            "n_layers": self.n_layers,
        }


if __name__ == "__main__":
    key = jax.random.PRNGKey(0)
    k_param, k_data = jax.random.split(key)

    batch = 8
    n_input = 64
    n_hidden_ls = [32, 16]
    n_layers = len(n_hidden_ls)

    model = NonLinearAutoencoderPallas(n_input, n_hidden_ls, n_layers, k_param)
    x = jax.random.normal(k_data, (batch, n_input), jnp.float32)

    encoded, decoded = jax.jit(model.__call__)(x)
    jax.block_until_ready((encoded, decoded))

    assert encoded.shape == (batch, n_hidden_ls[-1])
    assert decoded.shape == (batch, n_input)

    # Reference: plain-JAX Linear+ReLU chain matching the PyTorch module exactly.
    ref = x
    for w, b in model.encoder_raw:
        ref = jnp.maximum(ref @ w.T + b, 0.0)           # ReLU after every encoder layer
    ref_enc = ref
    for idx, (w, b) in enumerate(model.decoder_raw):
        ref = ref @ w.T + b
        if idx < len(model.decoder_raw) - 1:            # no ReLU after last decoder layer
            ref = jnp.maximum(ref, 0.0)
    assert jnp.allclose(encoded, ref_enc, atol=1e-5, rtol=1e-5)
    assert jnp.allclose(decoded, ref, atol=1e-5, rtol=1e-5)

    # Exercise standalone encode()/decode() paths as well.
    enc2 = model.encode(x)
    dec2 = model.decode(enc2)
    jax.block_until_ready((enc2, dec2))
    assert jnp.allclose(enc2, ref_enc, atol=1e-5, rtol=1e-5)
    assert jnp.allclose(dec2, ref, atol=1e-5, rtol=1e-5)

    print("KERNEL_OK")
</pallas_src>

<mosaic_0001>
module attributes {stable_mosaic.version = 11 : i64} {
  func.func @_chain_kernel(%arg0: i32, %arg1: memref<8x128xf32, #tpu.memory_space<vmem>>, %arg2: memref<128x128xf32, #tpu.memory_space<vmem>>, %arg3: memref<1x128xf32, #tpu.memory_space<vmem>>, %arg4: memref<128x128xf32, #tpu.memory_space<vmem>>, %arg5: memref<1x128xf32, #tpu.memory_space<vmem>>, %arg6: memref<128x128xf32, #tpu.memory_space<vmem>>, %arg7: memref<1x128xf32, #tpu.memory_space<vmem>>, %arg8: memref<128x128xf32, #tpu.memory_space<vmem>>, %arg9: memref<1x128xf32, #tpu.memory_space<vmem>>, %arg10: memref<8x128xf32, #tpu.memory_space<vmem>>, %arg11: memref<8x128xf32, #tpu.memory_space<vmem>>) attributes {dimension_semantics = [#tpu.dimension_semantics<parallel>], iteration_bounds = array<i64: 1>, scalar_prefetch = 0 : i64, scratch_operands = 0 : i64, tpu.core_type = #tpu.core_type<tc>, window_params = [{transform_indices = @transform_0, window_bounds = array<i64: 8, 128>}, {pipeline_mode = #tpu.pipeline_mode<synchronous>, transform_indices = @transform_1, window_bounds = array<i64: 128, 128>}, {pipeline_mode = #tpu.pipeline_mode<synchronous>, transform_indices = @transform_2, window_bounds = array<i64: 1, 128>}, {pipeline_mode = #tpu.pipeline_mode<synchronous>, transform_indices = @transform_3, window_bounds = array<i64: 128, 128>}, {pipeline_mode = #tpu.pipeline_mode<synchronous>, transform_indices = @transform_4, window_bounds = array<i64: 1, 128>}, {pipeline_mode = #tpu.pipeline_mode<synchronous>, transform_indices = @transform_5, window_bounds = array<i64: 128, 128>}, {pipeline_mode = #tpu.pipeline_mode<synchronous>, transform_indices = @transform_6, window_bounds = array<i64: 1, 128>}, {pipeline_mode = #tpu.pipeline_mode<synchronous>, transform_indices = @transform_7, window_bounds = array<i64: 128, 128>}, {pipeline_mode = #tpu.pipeline_mode<synchronous>, transform_indices = @transform_8, window_bounds = array<i64: 1, 128>}, {transform_indices = @transform_9, window_bounds = array<i64: 8, 128>}, {transform_indices = @transform_10, window_bounds = array<i64: 8, 128>}]} {
    %c0 = arith.constant 0 : index
    %c0_0 = arith.constant 0 : index
    %0 = vector.load %arg1[%c0, %c0_0] : memref<8x128xf32, #tpu.memory_space<vmem>>, vector<8x128xf32>
    %c0_1 = arith.constant 0 : index
    %c0_2 = arith.constant 0 : index
    %1 = vector.load %arg2[%c0_1, %c0_2] : memref<128x128xf32, #tpu.memory_space<vmem>>, vector<128x128xf32>
    %c0_3 = arith.constant 0 : index
    %c0_4 = arith.constant 0 : index
    %2 = vector.load %arg3[%c0_3, %c0_4] : memref<1x128xf32, #tpu.memory_space<vmem>>, vector<1x128xf32>
    %cst = arith.constant dense<0.000000e+00> : vector<8x128xf32>
    %3 = tpu.matmul %0, %1, %cst {dimension_numbers = #tpu.dot_dimension_numbers<[1], [0], [0], [1], [0, 0, 1, 1], [], []>} : vector<8x128xf32>, vector<128x128xf32>, vector<8x128xf32> -> vector<8x128xf32>
    %4 = vector.broadcast %2 : vector<1x128xf32> to vector<8x128xf32>
    %5 = arith.addf %3, %4 : vector<8x128xf32>
    %cst_5 = arith.constant 0.000000e+00 : f32
    %6 = vector.broadcast %cst_5 : f32 to vector<8x128xf32>
    %7 = arith.maximumf %5, %6 : vector<8x128xf32>
    %c0_6 = arith.constant 0 : index
    %c0_7 = arith.constant 0 : index
    %8 = vector.load %arg4[%c0_6, %c0_7] : memref<128x128xf32, #tpu.memory_space<vmem>>, vector<128x128xf32>
    %c0_8 = arith.constant 0 : index
    %c0_9 = arith.constant 0 : index
    %9 = vector.load %arg5[%c0_8, %c0_9] : memref<1x128xf32, #tpu.memory_space<vmem>>, vector<1x128xf32>
    %cst_10 = arith.constant dense<0.000000e+00> : vector<8x128xf32>
    %10 = tpu.matmul %7, %8, %cst_10 {dimension_numbers = #tpu.dot_dimension_numbers<[1], [0], [0], [1], [0, 0, 1, 1], [], []>} : vector<8x128xf32>, vector<128x128xf32>, vector<8x128xf32> -> vector<8x128xf32>
    %11 = vector.broadcast %9 : vector<1x128xf32> to vector<8x128xf32>
    %12 = arith.addf %10, %11 : vector<8x128xf32>
    %cst_11 = arith.constant 0.000000e+00 : f32
    %13 = vector.broadcast %cst_11 : f32 to vector<8x128xf32>
    %14 = arith.maximumf %12, %13 : vector<8x128xf32>
    %c0_12 = arith.constant 0 : index
    %c0_13 = arith.constant 0 : index
    %15 = vector.load %arg10[%c0_12, %c0_13] : memref<8x128xf32, #tpu.memory_space<vmem>>, vector<8x128xf32>
    tpu.vector_store %arg10[%c0_12, %c0_13], %14 {strides = array<i32>} : memref<8x128xf32, #tpu.memory_space<vmem>>, vector<8x128xf32>,
    %c0_14 = arith.constant 0 : index
    %c0_15 = arith.constant 0 : index
    %16 = vector.load %arg6[%c0_14, %c0_15] : memref<128x128xf32, #tpu.memory_space<vmem>>, vector<128x128xf32>
    %c0_16 = arith.constant 0 : index
    %c0_17 = arith.constant 0 : index
    %17 = vector.load %arg7[%c0_16, %c0_17] : memref<1x128xf32, #tpu.memory_space<vmem>>, vector<1x128xf32>
    %cst_18 = arith.constant dense<0.000000e+00> : vector<8x128xf32>
    %18 = tpu.matmul %14, %16, %cst_18 {dimension_numbers = #tpu.dot_dimension_numbers<[1], [0], [0], [1], [0, 0, 1, 1], [], []>} : vector<8x128xf32>, vector<128x128xf32>, vector<8x128xf32> -> vector<8x128xf32>
    %19 = vector.broadcast %17 : vector<1x128xf32> to vector<8x128xf32>
    %20 = arith.addf %18, %19 : vector<8x128xf32>
    %cst_19 = arith.constant 0.000000e+00 : f32
    %21 = vector.broadcast %cst_19 : f32 to vector<8x128xf32>
    %22 = arith.maximumf %20, %21 : vector<8x128xf32>
    %c0_20 = arith.constant 0 : index
    %c0_21 = arith.constant 0 : index
    %23 = vector.load %arg8[%c0_20, %c0_21] : memref<128x128xf32, #tpu.memory_space<vmem>>, vector<128x128xf32>
    %c0_22 = arith.constant 0 : index
    %c0_23 = arith.constant 0 : index
    %24 = vector.load %arg9[%c0_22, %c0_23] : memref<1x128xf32, #tpu.memory_space<vmem>>, vector<1x128xf32>
    %cst_24 = arith.constant dense<0.000000e+00> : vector<8x128xf32>
    %25 = tpu.matmul %22, %23, %cst_24 {dimension_numbers = #tpu.dot_dimension_numbers<[1], [0], [0], [1], [0, 0, 1, 1], [], []>} : vector<8x128xf32>, vector<128x128xf32>, vector<8x128xf32> -> vector<8x128xf32>
    %26 = vector.broadcast %24 : vector<1x128xf32> to vector<8x128xf32>
    %27 = arith.addf %25, %26 : vector<8x128xf32>
    %c0_25 = arith.constant 0 : index
    %c0_26 = arith.constant 0 : index
    %28 = vector.load %arg11[%c0_25, %c0_26] : memref<8x128xf32, #tpu.memory_space<vmem>>, vector<8x128xf32>
    tpu.vector_store %arg11[%c0_25, %c0_26], %27 {strides = array<i32>} : memref<8x128xf32, #tpu.memory_space<vmem>>, vector<8x128xf32>,
    return
  }
  func.func @transform_0(%arg0: i32) -> (i32, i32) {
    %c0_i32 = arith.constant 0 : i32
    %c0_i32_0 = arith.constant 0 : i32
    return %arg0, %c0_i32 : i32, i32
  }
  func.func @transform_1(%arg0: i32) -> (i32, i32) {
    %c0_i32 = arith.constant 0 : i32
    %c0_i32_0 = arith.constant 0 : i32
    %c0_i32_1 = arith.constant 0 : i32
    return %c0_i32, %c0_i32_0 : i32, i32
  }
  func.func @transform_2(%arg0: i32) -> (i32, i32) {
    %c0_i32 = arith.constant 0 : i32
    %c0_i32_0 = arith.constant 0 : i32
    %c0_i32_1 = arith.constant 0 : i32
    return %c0_i32, %c0_i32_0 : i32, i32
  }
  func.func @transform_3(%arg0: i32) -> (i32, i32) {
    %c0_i32 = arith.constant 0 : i32
    %c0_i32_0 = arith.constant 0 : i32
    %c0_i32_1 = arith.constant 0 : i32
    return %c0_i32, %c0_i32_0 : i32, i32
  }
  func.func @transform_4(%arg0: i32) -> (i32, i32) {
    %c0_i32 = arith.constant 0 : i32
    %c0_i32_0 = arith.constant 0 : i32
    %c0_i32_1 = arith.constant 0 : i32
    return %c0_i32, %c0_i32_0 : i32, i32
  }
  func.func @transform_5(%arg0: i32) -> (i32, i32) {
    %c0_i32 = arith.constant 0 : i32
    %c0_i32_0 = arith.constant 0 : i32
    %c0_i32_1 = arith.constant 0 : i32
    return %c0_i32, %c0_i32_0 : i32, i32
  }
  func.func @transform_6(%arg0: i32) -> (i32, i32) {
    %c0_i32 = arith.constant 0 : i32
    %c0_i32_0 = arith.constant 0 : i32
    %c0_i32_1 = arith.constant 0 : i32
    return %c0_i32, %c0_i32_0 : i32, i32
  }
  func.func @transform_7(%arg0: i32) -> (i32, i32) {
    %c0_i32 = arith.constant 0 : i32
    %c0_i32_0 = arith.constant 0 : i32
    %c0_i32_1 = arith.constant 0 : i32
    return %c0_i32, %c0_i32_0 : i32, i32
  }
  func.func @transform_8(%arg0: i32) -> (i32, i32) {
    %c0_i32 = arith.constant 0 : i32
    %c0_i32_0 = arith.constant 0 : i32
    %c0_i32_1 = arith.constant 0 : i32
    return %c0_i32, %c0_i32_0 : i32, i32
  }
  func.func @transform_9(%arg0: i32) -> (i32, i32) {
    %c0_i32 = arith.constant 0 : i32
    %c0_i32_0 = arith.constant 0 : i32
    return %arg0, %c0_i32 : i32, i32
  }
  func.func @transform_10(%arg0: i32) -> (i32, i32) {
    %c0_i32 = arith.constant 0 : i32
    %c0_i32_0 = arith.constant 0 : i32
    return %arg0, %c0_i32 : i32, i32
  }
}

</mosaic_0001>

<llo_original>
// kernel: a_call__.1
$region0: #{a_call__.1}
  #allocation0 [shape = 'u32[]', space=smem, size = 0x4, offset = 0x4, fixed_abs, tag = 'smem constant byte address 0x4 - core index']
  #allocation1 [shape = 'u32[144,128]{1,0:T(1,128)}', space=vmem, size = 0x12000, scoped, tag = 'internal scratch']
  %s0 = inlined_call_operand.vmem [shape: f32[8,128], index: 0, kind: input, shape index: {}]
  %s1 = inlined_call_operand.hbm [shape: f32[128,128], index: 1, kind: input, shape index: {}]
  %s2 = inlined_call_operand.vmem [shape: f32[1,128], index: 2, kind: input, shape index: {}]
  %s3 = inlined_call_operand.hbm [shape: f32[128,128], index: 3, kind: input, shape index: {}]
  %s4 = inlined_call_operand.vmem [shape: f32[1,128], index: 4, kind: input, shape index: {}]
  %s5 = inlined_call_operand.hbm [shape: f32[128,128], index: 5, kind: input, shape index: {}]
  %s6 = inlined_call_operand.vmem [shape: f32[1,128], index: 6, kind: input, shape index: {}]
  %s7 = inlined_call_operand.hbm [shape: f32[128,128], index: 7, kind: input, shape index: {}]
  %s8 = inlined_call_operand.vmem [shape: f32[1,128], index: 8, kind: input, shape index: {}]
  %s9 = inlined_call_operand.hbm [shape: f32[8,128], index: 9, kind: output, shape index: {0}]
  %s10 = inlined_call_operand.hbm [shape: f32[8,128], index: 10, kind: output, shape index: {1}]
  %11 = xla_tuple %s9, %s10
  %s12 = sld [smem:[#allocation0]]
  $region70: #{a_call__.1} parent=0
    _
  %s14 = ssub.s32 1, %s12
  %s15 = scalar_select 0, %s14, %s12
  $region1: #{a_call__.1} parent=0
    #allocation2 [shape = 'u8[65536]{0}', space=vmem, size = 0x10000, scoped, tag = 'input window, operand 1, single buffered']
    #allocation3 [shape = 's32[1]{0}', space=sflag, size = 0x4, scoped, tag = 'scoped memory for a_call__.1']
    #allocation4 [shape = 's32[1]{0}', space=sflag, size = 0x4, scoped, tag = 'scoped memory for a_call__.1']
    #allocation5 [shape = 'u8[65536]{0}', space=vmem, size = 0x10000, scoped, tag = 'input window, operand 3, single buffered']
    #allocation6 [shape = 's32[1]{0}', space=sflag, size = 0x4, scoped, tag = 'scoped memory for a_call__.1']
    #allocation7 [shape = 'u8[65536]{0}', space=vmem, size = 0x10000, scoped, tag = 'input window, operand 5, single buffered']
    #allocation8 [shape = 'u8[65536]{0}', space=vmem, size = 0x10000, scoped, tag = 'input window, operand 7, single buffered']
    #allocation9 [shape = 's32[1]{0}', space=sflag, size = 0x4, scoped, tag = 'scoped memory for a_call__.1']
    #allocation10 [shape = 'u8[4096]{0}', space=vmem, size = 0x1000, scoped, tag = 'output window, operand 0, single buffered']
    #allocation11 [shape = 'u8[4096]{0}', space=vmem, size = 0x1000, scoped, tag = 'output window, operand 1, single buffered']
    #allocation12 [shape = 's32[1]{0}', space=sflag, size = 0x4, scoped, tag = 'scoped memory for a_call__.1']
    %16 = vsyncpa [#allocation3], 0
    %17 = vsyncpa [#allocation6], 0
    %18 = vsyncpa [#allocation9], 0
    %19 = vsyncpa [#allocation4], 0
    %20 = vsyncpa [#allocation12], 0
    // Predicated region
    $region2: #{a_call__.1} parent=1 // pred_check
      _
    $region3: #{a_call__.1} parent=1 // pred_check_branch
      %22 = sbr.rel (0) target = $region5
    $region4: #{a_call__.1} parent=1 // pred_region
      _
    $region5: #{a_call__.1} parent=1 // pred_fallthru
      _
    // Predicated region
    $region6: #{a_call__.1} parent=1 // pred_check
      _
    $region7: #{a_call__.1} parent=1 // pred_check_branch
      %24 = sbr.rel (0) target = $region9
    $region8: #{a_call__.1} parent=1 // pred_region
      %s26 = ssub.s32 2048, 2048
      %27 = vsyncadd [#allocation3], %s26
      %s28 = sshll.u32 [#allocation2], 4
      %s29 = int_to_ptr.vmem [resolvable:$true] %s28
      %34 = dma.hbm_to_vmem [thread:$0]  %s1, 2048, %s29, [#allocation3], 128, 128, 8
    $region9: #{a_call__.1} parent=1 // pred_fallthru
      _
    // Predicated region
    $region10: #{a_call__.1} parent=1 // pred_check
      _
    $region11: #{a_call__.1} parent=1 // pred_check_branch
      %36 = sbr.rel (0) target = $region13
    $region12: #{a_call__.1} parent=1 // pred_region
      _
    $region13: #{a_call__.1} parent=1 // pred_fallthru
      _
    // Predicated region
    $region14: #{a_call__.1} parent=1 // pred_check
      _
    $region15: #{a_call__.1} parent=1 // pred_check_branch
      %38 = sbr.rel (0) target = $region17
    $region16: #{a_call__.1} parent=1 // pred_region
      %s40 = ssub.s32 2048, 2048
      %41 = vsyncadd [#allocation6], %s40
      %s42 = sshll.u32 [#allocation5], 4
      %s43 = int_to_ptr.vmem [resolvable:$true] %s42
      %48 = dma.hbm_to_vmem [thread:$0]  %s3, 2048, %s43, [#allocation6], 128, 128, 8
    $region17: #{a_call__.1} parent=1 // pred_fallthru
      _
    // Predicated region
    $region18: #{a_call__.1} parent=1 // pred_check
      _
    $region19: #{a_call__.1} parent=1 // pred_check_branch
      %50 = sbr.rel (0) target = $region21
    $region20: #{a_call__.1} parent=1 // pred_region
      _
    $region21: #{a_call__.1} parent=1 // pred_fallthru
      _
    // Predicated region
    $region22: #{a_call__.1} parent=1 // pred_check
      _
    $region23: #{a_call__.1} parent=1 // pred_check_branch
      %52 = sbr.rel (0) target = $region25
    $region24: #{a_call__.1} parent=1 // pred_region
      %s54 = ssub.s32 2048, 2048
      %55 = vsyncadd [#allocation6], %s54
      %s56 = sshll.u32 [#allocation7], 4
      %s57 = int_to_ptr.vmem [resolvable:$true] %s56
      %62 = dma.hbm_to_vmem [thread:$0]  %s5, 2048, %s57, [#allocation6], 128, 128, 8
    $region25: #{a_call__.1} parent=1 // pred_fallthru
      _
    // Predicated region
    $region26: #{a_call__.1} parent=1 // pred_check
      _
    $region27: #{a_call__.1} parent=1 // pred_check_branch
      %64 = sbr.rel (0) target = $region29
    $region28: #{a_call__.1} parent=1 // pred_region
      _
    $region29: #{a_call__.1} parent=1 // pred_fallthru
      _
    // Predicated region
    $region30: #{a_call__.1} parent=1 // pred_check
      _
    $region31: #{a_call__.1} parent=1 // pred_check_branch
      %66 = sbr.rel (0) target = $region33
    $region32: #{a_call__.1} parent=1 // pred_region
      %s68 = ssub.s32 2048, 2048
      %69 = vsyncadd [#allocation9], %s68
      %s70 = sshll.u32 [#allocation8], 4
      %s71 = int_to_ptr.vmem [resolvable:$true] %s70
      %76 = dma.hbm_to_vmem [thread:$0]  %s7, 2048, %s71, [#allocation9], 128, 128, 8
    $region33: #{a_call__.1} parent=1 // pred_fallthru
      _
    // Predicated region
    $region34: #{a_call__.1} parent=1 // pred_check
      _
    $region35: #{a_call__.1} parent=1 // pred_check_branch
      %78 = sbr.rel (0) target = $region37
    $region36: #{a_call__.1} parent=1 // pred_region
      _
    $region37: #{a_call__.1} parent=1 // pred_fallthru
      _
    // Predicated region
    $region38: #{a_call__.1} parent=1 // pred_check
      _
    $region39: #{a_call__.1} parent=1 // pred_check_branch
      %80 = sbr.rel (0) target = $region41
    $region40: #{a_call__.1} parent=1 // pred_region
      %81 = dma.done [#allocation3], 2048
    $region41: #{a_call__.1} parent=1 // pred_fallthru
      _
    // Predicated region
    $region42: #{a_call__.1} parent=1 // pred_check
      _
    $region43: #{a_call__.1} parent=1 // pred_check_branch
      %83 = sbr.rel (0) target = $region45
    $region44: #{a_call__.1} parent=1 // pred_region
      %84 = dma.done [#allocation6], 2048
    $region45: #{a_call__.1} parent=1 // pred_fallthru
      _
    // Predicated region
    $region46: #{a_call__.1} parent=1 // pred_check
      _
    $region47: #{a_call__.1} parent=1 // pred_check_branch
      %86 = sbr.rel (0) target = $region49
    $region48: #{a_call__.1} parent=1 // pred_region
      %87 = dma.done [#allocation6], 2048
    $region49: #{a_call__.1} parent=1 // pred_fallthru
      _
    // Predicated region
    $region50: #{a_call__.1} parent=1 // pred_check
      _
    $region51: #{a_call__.1} parent=1 // pred_check_branch
      %89 = sbr.rel (0) target = $region53
    $region52: #{a_call__.1} parent=1 // pred_region
      %90 = dma.done [#allocation9], 2048
    $region53: #{a_call__.1} parent=1 // pred_fallthru
      _
    %v91 = vld [vmem:[%s0] sm:$0xff]
    %v92 = vld [vmem:[#allocation2] sm:$0xff]
    %v93 = vld [vmem:[#allocation2 + $0x8] sm:$0xff]
    %v94 = vld [vmem:[#allocation2 + $0x10] sm:$0xff]
    %v95 = vld [vmem:[#allocation2 + $0x18] sm:$0xff]
    %v96 = vld [vmem:[#allocation2 + $0x20] sm:$0xff]
    %v97 = vld [vmem:[#allocation2 + $0x28] sm:$0xff]
    %v98 = vld [vmem:[#allocation2 + $0x30] sm:$0xff]
    %v99 = vld [vmem:[#allocation2 + $0x38] sm:$0xff]
    %v100 = vld [vmem:[#allocation2 + $0x40] sm:$0xff]
    %v101 = vld [vmem:[#allocation2 + $0x48] sm:$0xff]
    %v102 = vld [vmem:[#allocation2 + $0x50] sm:$0xff]
    %v103 = vld [vmem:[#allocation2 + $0x58] sm:$0xff]
    %v104 = vld [vmem:[#allocation2 + $0x60] sm:$0xff]
    %v105 = vld [vmem:[#allocation2 + $0x68] sm:$0xff]
    %v106 = vld [vmem:[#allocation2 + $0x70] sm:$0xff]
    %v107 = vld [vmem:[#allocation2 + $0x78] sm:$0xff]
    %v108 = vld [vmem:[%s2] sm:$0x1]
    %v110 = vlaneseq
    %v111 = vshrl.u32 %v110, 7
    %v112 = vsub.s32 0, %v111
    %v113 = vrot.slane %v108, %v112
    %115 = vmatprep.subr.mxu0 0.0
    %116 = vmatpush1.msra.mxu0 %v92
    %117 = vmatprep.subr.mxu0 0.0
    %118 = vmatpush1.msra.mxu0 %v93
    %119 = vmatprep.subr.mxu0 0.0
    %120 = vmatpush1.msra.mxu0 %v94
    %121 = vmatprep.subr.mxu0 0.0
    %122 = vmatpush1.msra.mxu0 %v95
    %123 = vmatprep.subr.mxu0 0.0
    %124 = vmatpush1.msra.mxu0 %v96
    %125 = vmatprep.subr.mxu0 0.0
    %126 = vmatpush1.msra.mxu0 %v97
    %127 = vmatprep.subr.mxu0 0.0
    %128 = vmatpush1.msra.mxu0 %v98
    %129 = vmatprep.subr.mxu0 0.0
    %130 = vmatpush1.msra.mxu0 %v99
    %131 = vmatprep.subr.mxu0 0.0
    %132 = vmatpush1.msra.mxu0 %v100
    %133 = vmatprep.subr.mxu0 0.0
    %134 = vmatpush1.msra.mxu0 %v101
    %135 = vmatprep.subr.mxu0 0.0
    %136 = vmatpush1.msra.mxu0 %v102
    %137 = vmatprep.subr.mxu0 0.0
    %138 = vmatpush1.msra.mxu0 %v103
    %139 = vmatprep.subr.mxu0 0.0
    %140 = vmatpush1.msra.mxu0 %v104
    %141 = vmatprep.subr.mxu0 0.0
    %142 = vmatpush1.msra.mxu0 %v105
    %143 = vmatprep.subr.mxu0 0.0
    %144 = vmatpush1.msra.mxu0 %v106
    %145 = vmatprep.subr.mxu0 0.0
    %146 = vmatpush1.msra.mxu0 %v107
    %147 = vmatprep.subr.mxu0 0.0
    %148 = vmatpush1.msra.mxu0 0.0
    %149 = vmatprep.subr.mxu0 0.0
    %150 = vmatpush1.msra.mxu0 0.0
    %151 = vmatprep.subr.mxu0 0.0
    %152 = vmatpush1.msra.mxu0 0.0
    %153 = vmatprep.subr.mxu0 0.0
    %154 = vmatpush1.msra.mxu0 0.0
    %155 = vmatprep.subr.mxu0 0.0
    %156 = vmatpush1.msra.mxu0 0.0
    %157 = vmatprep.subr.mxu0 0.0
    %158 = vmatpush1.msra.mxu0 0.0
    %159 = vmatprep.subr.mxu0 0.0
    %160 = vmatpush1.msra.mxu0 0.0
    %161 = vmatprep.subr.mxu0 0.0
    %162 = vmatpush1.msra.mxu0 0.0
    %163 = vmatprep.subr.mxu0 0.0
    %164 = vmatpush1.msra.mxu0 0.0
    %165 = vmatprep.subr.mxu0 0.0
    %166 = vmatpush1.msra.mxu0 0.0
    %167 = vmatprep.subr.mxu0 0.0
    %168 = vmatpush1.msra.mxu0 0.0
    %169 = vmatprep.subr.mxu0 0.0
    %170 = vmatpush1.msra.mxu0 0.0
    %171 = vmatprep.subr.mxu0 0.0
    %172 = vmatpush1.msra.mxu0 0.0
    %173 = vmatprep.subr.mxu0 0.0
    %174 = vmatpush1.msra.mxu0 0.0
    %175 = vmatprep.subr.mxu0 0.0
    %176 = vmatpush1.msra.mxu0 0.0
    %177 = vmatprep.subr.mxu0 0.0
    %178 = vmatpush1.msra.mxu0 0.0
    %179 = vmatprep.mubr.f32.mxu0 0.0
    %180 = vmatmul.mubr.f32.gmra.mrb[0].mxu0 %v91
    %v181 = vpop.f32.mrb[0].mxu0
    %v182 = vadd.f32 %v113, %v181
    %v183 = vpop.f32.mrb[0].mxu0
    %184 = vdwg.mxu0
    %v185 = vmax.f32 %v182, 0.0
    %v186 = vld [vmem:[#allocation5] sm:$0xff]
    %v187 = vld [vmem:[#allocation5 + $0x8] sm:$0xff]
    %v188 = vld [vmem:[#allocation5 + $0x10] sm:$0xff]
    %v189 = vld [vmem:[#allocation5 + $0x18] sm:$0xff]
    %v190 = vld [vmem:[#allocation5 + $0x20] sm:$0xff]
    %v191 = vld [vmem:[#allocation5 + $0x28] sm:$0xff]
    %v192 = vld [vmem:[#allocation5 + $0x30] sm:$0xff]
    %v193 = vld [vmem:[#allocation5 + $0x38] sm:$0xff]
    %v194 = vld [vmem:[#allocation5 + $0x40] sm:$0xff]
    %v195 = vld [vmem:[#allocation5 + $0x48] sm:$0xff]
    %v196 = vld [vmem:[#allocation5 + $0x50] sm:$0xff]
    %v197 = vld [vmem:[#allocation5 + $0x58] sm:$0xff]
    %v198 = vld [vmem:[#allocation5 + $0x60] sm:$0xff]
    %v199 = vld [vmem:[#allocation5 + $0x68] sm:$0xff]
    %v200 = vld [vmem:[#allocation5 + $0x70] sm:$0xff]
    %v201 = vld [vmem:[#allocation5 + $0x78] sm:$0xff]
    %v202 = vld [vmem:[%s4] sm:$0x1]
    %v204 = vlaneseq
    %v205 = vshrl.u32 %v204, 7
    %v206 = vsub.s32 0, %v205
    %v207 = vrot.slane %v202, %v206
    %209 = vmatprep.subr.mxu0 0.0
    %210 = vmatpush1.msra.mxu0 %v186
    %211 = vmatprep.subr.mxu0 0.0
    %212 = vmatpush1.msra.mxu0 %v187
    %213 = vmatprep.subr.mxu0 0.0
    %214 = vmatpush1.msra.mxu0 %v188
    %215 = vmatprep.subr.mxu0 0.0
    %216 = vmatpush1.msra.mxu0 %v189
    %217 = vmatprep.subr.mxu0 0.0
    %218 = vmatpush1.msra.mxu0 %v190
    %219 = vmatprep.subr.mxu0 0.0
    %220 = vmatpush1.msra.mxu0 %v191
    %221 = vmatprep.subr.mxu0 0.0
    %222 = vmatpush1.msra.mxu0 %v192
    %223 = vmatprep.subr.mxu0 0.0
    %224 = vmatpush1.msra.mxu0 %v193
    %225 = vmatprep.subr.mxu0 0.0
    %226 = vmatpush1.msra.mxu0 %v194
    %227 = vmatprep.subr.mxu0 0.0
    %228 = vmatpush1.msra.mxu0 %v195
    %229 = vmatprep.subr.mxu0 0.0
    %230 = vmatpush1.msra.mxu0 %v196
    %231 = vmatprep.subr.mxu0 0.0
    %232 = vmatpush1.msra.mxu0 %v197
    %233 = vmatprep.subr.mxu0 0.0
    %234 = vmatpush1.msra.mxu0 %v198
    %235 = vmatprep.subr.mxu0 0.0
    %236 = vmatpush1.msra.mxu0 %v199
    %237 = vmatprep.subr.mxu0 0.0
    %238 = vmatpush1.msra.mxu0 %v200
    %239 = vmatprep.subr.mxu0 0.0
    %240 = vmatpush1.msra.mxu0 %v201
    %241 = vmatprep.subr.mxu0 0.0
    %242 = vmatpush1.msra.mxu0 0.0
    %243 = vmatprep.subr.mxu0 0.0
    %244 = vmatpush1.msra.mxu0 0.0
    %245 = vmatprep.subr.mxu0 0.0
    %246 = vmatpush1.msra.mxu0 0.0
    %247 = vmatprep.subr.mxu0 0.0
    %248 = vmatpush1.msra.mxu0 0.0
    %249 = vmatprep.subr.mxu0 0.0
    %250 = vmatpush1.msra.mxu0 0.0
    %251 = vmatprep.subr.mxu0 0.0
    %252 = vmatpush1.msra.mxu0 0.0
    %253 = vmatprep.subr.mxu0 0.0
    %254 = vmatpush1.msra.mxu0 0.0
    %255 = vmatprep.subr.mxu0 0.0
    %256 = vmatpush1.msra.mxu0 0.0
    %257 = vmatprep.subr.mxu0 0.0
    %258 = vmatpush1.msra.mxu0 0.0
    %259 = vmatprep.subr.mxu0 0.0
    %260 = vmatpush1.msra.mxu0 0.0
    %261 = vmatprep.subr.mxu0 0.0
    %262 = vmatpush1.msra.mxu0 0.0
    %263 = vmatprep.subr.mxu0 0.0
    %264 = vmatpush1.msra.mxu0 0.0
    %265 = vmatprep.subr.mxu0 0.0
    %266 = vmatpush1.msra.mxu0 0.0
    %267 = vmatprep.subr.mxu0 0.0
    %268 = vmatpush1.msra.mxu0 0.0
    %269 = vmatprep.subr.mxu0 0.0
    %270 = vmatpush1.msra.mxu0 0.0
    %271 = vmatprep.subr.mxu0 0.0
    %272 = vmatpush1.msra.mxu0 0.0
    %273 = vmatprep.mubr.f32.mxu0 0.0
    %274 = vmatmul.mubr.f32.gmra.mrb[0].mxu0 %v185
    %v275 = vpop.f32.mrb[0].mxu0
    %v276 = vadd.f32 %v207, %v275
    %v277 = vpop.f32.mrb[0].mxu0
    %278 = vdwg.mxu0
    %v279 = vmax.f32 %v276, 0.0
    %280 = vst [vmem:[#allocation10] sm:$0xff] %v279
    %v281 = vld [vmem:[#allocation7] sm:$0xff]
    %v282 = vld [vmem:[#allocation7 + $0x8] sm:$0xff]
    %v283 = vld [vmem:[#allocation7 + $0x10] sm:$0xff]
    %v284 = vld [vmem:[#allocation7 + $0x18] sm:$0xff]
    %v285 = vld [vmem:[#allocation7 + $0x20] sm:$0xff]
    %v286 = vld [vmem:[#allocation7 + $0x28] sm:$0xff]
    %v287 = vld [vmem:[#allocation7 + $0x30] sm:$0xff]
    %v288 = vld [vmem:[#allocation7 + $0x38] sm:$0xff]
    %v289 = vld [vmem:[#allocation7 + $0x40] sm:$0xff]
    %v290 = vld [vmem:[#allocation7 + $0x48] sm:$0xff]
    %v291 = vld [vmem:[#allocation7 + $0x50] sm:$0xff]
    %v292 = vld [vmem:[#allocation7 + $0x58] sm:$0xff]
    %v293 = vld [vmem:[#allocation7 + $0x60] sm:$0xff]
    %v294 = vld [vmem:[#allocation7 + $0x68] sm:$0xff]
    %v295 = vld [vmem:[#allocation7 + $0x70] sm:$0xff]
    %v296 = vld [vmem:[#allocation7 + $0x78] sm:$0xff]
    %v297 = vld [vmem:[%s6] sm:$0x1]
    %v299 = vlaneseq
    %v300 = vshrl.u32 %v299, 7
    %v301 = vsub.s32 0, %v300
    %v302 = vrot.slane %v297, %v301
    %304 = vmatprep.subr.mxu0 0.0
    %305 = vmatpush1.msra.mxu0 %v281
    %306 = vmatprep.subr.mxu0 0.0
    %307 = vmatpush1.msra.mxu0 %v282
    %308 = vmatprep.subr.mxu0 0.0
    %309 = vmatpush1.msra.mxu0 %v283
    %310 = vmatprep.subr.mxu0 0.0
    %311 = vmatpush1.msra.mxu0 %v284
    %312 = vmatprep.subr.mxu0 0.0
    %313 = vmatpush1.msra.mxu0 %v285
    %314 = vmatprep.subr.mxu0 0.0
    %315 = vmatpush1.msra.mxu0 %v286
    %316 = vmatprep.subr.mxu0 0.0
    %317 = vmatpush1.msra.mxu0 %v287
    %318 = vmatprep.subr.mxu0 0.0
    %319 = vmatpush1.msra.mxu0 %v288
    %320 = vmatprep.subr.mxu0 0.0
    %321 = vmatpush1.msra.mxu0 %v289
    %322 = vmatprep.subr.mxu0 0.0
    %323 = vmatpush1.msra.mxu0 %v290
    %324 = vmatprep.subr.mxu0 0.0
    %325 = vmatpush1.msra.mxu0 %v291
    %326 = vmatprep.subr.mxu0 0.0
    %327 = vmatpush1.msra.mxu0 %v292
    %328 = vmatprep.subr.mxu0 0.0
    %329 = vmatpush1.msra.mxu0 %v293
    %330 = vmatprep.subr.mxu0 0.0
    %331 = vmatpush1.msra.mxu0 %v294
    %332 = vmatprep.subr.mxu0 0.0
    %333 = vmatpush1.msra.mxu0 %v295
    %334 = vmatprep.subr.mxu0 0.0
    %335 = vmatpush1.msra.mxu0 %v296
    %336 = vmatprep.subr.mxu0 0.0
    %337 = vmatpush1.msra.mxu0 0.0
    %338 = vmatprep.subr.mxu0 0.0
    %339 = vmatpush1.msra.mxu0 0.0
    %340 = vmatprep.subr.mxu0 0.0
    %341 = vmatpush1.msra.mxu0 0.0
    %342 = vmatprep.subr.mxu0 0.0
    %343 = vmatpush1.msra.mxu0 0.0
    %344 = vmatprep.subr.mxu0 0.0
    %345 = vmatpush1.msra.mxu0 0.0
    %346 = vmatprep.subr.mxu0 0.0
    %347 = vmatpush1.msra.mxu0 0.0
    %348 = vmatprep.subr.mxu0 0.0
    %349 = vmatpush1.msra.mxu0 0.0
    %350 = vmatprep.subr.mxu0 0.0
    %351 = vmatpush1.msra.mxu0 0.0
    %352 = vmatprep.subr.mxu0 0.0
    %353 = vmatpush1.msra.mxu0 0.0
    %354 = vmatprep.subr.mxu0 0.0
    %355 = vmatpush1.msra.mxu0 0.0
    %356 = vmatprep.subr.mxu0 0.0
    %357 = vmatpush1.msra.mxu0 0.0
    %358 = vmatprep.subr.mxu0 0.0
    %359 = vmatpush1.msra.mxu0 0.0
    %360 = vmatprep.subr.mxu0 0.0
    %361 = vmatpush1.msra.mxu0 0.0
    %362 = vmatprep.subr.mxu0 0.0
    %363 = vmatpush1.msra.mxu0 0.0
    %364 = vmatprep.subr.mxu0 0.0
    %365 = vmatpush1.msra.mxu0 0.0
    %366 = vmatprep.subr.mxu0 0.0
    %367 = vmatpush1.msra.mxu0 0.0
    %368 = vmatprep.mubr.f32.mxu0 0.0
    %369 = vmatmul.mubr.f32.gmra.mrb[0].mxu0 %v279
    %v370 = vpop.f32.mrb[0].mxu0
    %v371 = vadd.f32 %v302, %v370
    %v372 = vpop.f32.mrb[0].mxu0
    %373 = vdwg.mxu0
    %v374 = vmax.f32 %v371, 0.0
    %v375 = vld [vmem:[#allocation8] sm:$0xff]
    %v376 = vld [vmem:[#allocation8 + $0x8] sm:$0xff]
    %v377 = vld [vmem:[#allocation8 + $0x10] sm:$0xff]
    %v378 = vld [vmem:[#allocation8 + $0x18] sm:$0xff]
    %v379 = vld [vmem:[#allocation8 + $0x20] sm:$0xff]
    %v380 = vld [vmem:[#allocation8 + $0x28] sm:$0xff]
    %v381 = vld [vmem:[#allocation8 + $0x30] sm:$0xff]
    %v382 = vld [vmem:[#allocation8 + $0x38] sm:$0xff]
    %v383 = vld [vmem:[#allocation8 + $0x40] sm:$0xff]
    %v384 = vld [vmem:[#allocation8 + $0x48] sm:$0xff]
    %v385 = vld [vmem:[#allocation8 + $0x50] sm:$0xff]
    %v386 = vld [vmem:[#allocation8 + $0x58] sm:$0xff]
    %v387 = vld [vmem:[#allocation8 + $0x60] sm:$0xff]
    %v388 = vld [vmem:[#allocation8 + $0x68] sm:$0xff]
    %v389 = vld [vmem:[#allocation8 + $0x70] sm:$0xff]
    %v390 = vld [vmem:[#allocation8 + $0x78] sm:$0xff]
    %v391 = vld [vmem:[%s8] sm:$0x1]
    %v393 = vlaneseq
    %v394 = vshrl.u32 %v393, 7
    %v395 = vsub.s32 0, %v394
    %v396 = vrot.slane %v391, %v395
    %398 = vmatprep.subr.mxu0 0.0
    %399 = vmatpush1.msra.mxu0 %v375
    %400 = vmatprep.subr.mxu0 0.0
    %401 = vmatpush1.msra.mxu0 %v376
    %402 = vmatprep.subr.mxu0 0.0
    %403 = vmatpush1.msra.mxu0 %v377
    %404 = vmatprep.subr.mxu0 0.0
    %405 = vmatpush1.msra.mxu0 %v378
    %406 = vmatprep.subr.mxu0 0.0
    %407 = vmatpush1.msra.mxu0 %v379
    %408 = vmatprep.subr.mxu0 0.0
    %409 = vmatpush1.msra.mxu0 %v380
    %410 = vmatprep.subr.mxu0 0.0
    %411 = vmatpush1.msra.mxu0 %v381
    %412 = vmatprep.subr.mxu0 0.0
    %413 = vmatpush1.msra.mxu0 %v382
    %414 = vmatprep.subr.mxu0 0.0
    %415 = vmatpush1.msra.mxu0 %v383
    %416 = vmatprep.subr.mxu0 0.0
    %417 = vmatpush1.msra.mxu0 %v384
    %418 = vmatprep.subr.mxu0 0.0
    %419 = vmatpush1.msra.mxu0 %v385
    %420 = vmatprep.subr.mxu0 0.0
    %421 = vmatpush1.msra.mxu0 %v386
    %422 = vmatprep.subr.mxu0 0.0
    %423 = vmatpush1.msra.mxu0 %v387
    %424 = vmatprep.subr.mxu0 0.0
    %425 = vmatpush1.msra.mxu0 %v388
    %426 = vmatprep.subr.mxu0 0.0
    %427 = vmatpush1.msra.mxu0 %v389
    %428 = vmatprep.subr.mxu0 0.0
    %429 = vmatpush1.msra.mxu0 %v390
    %430 = vmatprep.subr.mxu0 0.0
    %431 = vmatpush1.msra.mxu0 0.0
    %432 = vmatprep.subr.mxu0 0.0
    %433 = vmatpush1.msra.mxu0 0.0
    %434 = vmatprep.subr.mxu0 0.0
    %435 = vmatpush1.msra.mxu0 0.0
    %436 = vmatprep.subr.mxu0 0.0
    %437 = vmatpush1.msra.mxu0 0.0
    %438 = vmatprep.subr.mxu0 0.0
    %439 = vmatpush1.msra.mxu0 0.0
    %440 = vmatprep.subr.mxu0 0.0
    %441 = vmatpush1.msra.mxu0 0.0
    %442 = vmatprep.subr.mxu0 0.0
    %443 = vmatpush1.msra.mxu0 0.0
    %444 = vmatprep.subr.mxu0 0.0
    %445 = vmatpush1.msra.mxu0 0.0
    %446 = vmatprep.subr.mxu0 0.0
    %447 = vmatpush1.msra.mxu0 0.0
    %448 = vmatprep.subr.mxu0 0.0
    %449 = vmatpush1.msra.mxu0 0.0
    %450 = vmatprep.subr.mxu0 0.0
    %451 = vmatpush1.msra.mxu0 0.0
    %452 = vmatprep.subr.mxu0 0.0
    %453 = vmatpush1.msra.mxu0 0.0
    %454 = vmatprep.subr.mxu0 0.0
    %455 = vmatpush1.msra.mxu0 0.0
    %456 = vmatprep.subr.mxu0 0.0
    %457 = vmatpush1.msra.mxu0 0.0
    %458 = vmatprep.subr.mxu0 0.0
    %459 = vmatpush1.msra.mxu0 0.0
    %460 = vmatprep.subr.mxu0 0.0
    %461 = vmatpush1.msra.mxu0 0.0
    %462 = vmatprep.mubr.f32.mxu0 0.0
    %463 = vmatmul.mubr.f32.gmra.mrb[0].mxu0 %v374
    %v464 = vpop.f32.mrb[0].mxu0
    %v465 = vadd.f32 %v396, %v464
    %v466 = vpop.f32.mrb[0].mxu0
    %467 = vdwg.mxu0
    %468 = vst [vmem:[#allocation11] sm:$0xff] %v465
    // Predicated region
    $region54: #{a_call__.1} parent=1 // pred_check
      _
    $region55: #{a_call__.1} parent=1 // pred_check_branch
      %470 = sbr.rel (0) target = $region57
    $region56: #{a_call__.1} parent=1 // pred_region
      %s472 = ssub.s32 128, 128
      %473 = vsyncadd [#allocation4], %s472
      %s475 = sshll.u32 [#allocation10], 4
      %s476 = int_to_ptr.vmem [resolvable:$true] %s475
      %478 = dma.vmem_to_hbm [thread:$0]  %s476, 128, %s9, [#allocation4]
    $region57: #{a_call__.1} parent=1 // pred_fallthru
      _
    // Predicated region
    $region58: #{a_call__.1} parent=1 // pred_check
      _
    $region59: #{a_call__.1} parent=1 // pred_check_branch
      %480 = sbr.rel (0) target = $region61
    $region60: #{a_call__.1} parent=1 // pred_region
      %s482 = ssub.s32 128, 128
      %483 = vsyncadd [#allocation12], %s482
      %s485 = sshll.u32 [#allocation11], 4
      %s486 = int_to_ptr.vmem [resolvable:$true] %s485
      %488 = dma.vmem_to_hbm [thread:$0]  %s486, 128, %s10, [#allocation12]
    $region61: #{a_call__.1} parent=1 // pred_fallthru
      _
    // Predicated region
    $region62: #{a_call__.1} parent=1 // pred_check
      _
    $region63: #{a_call__.1} parent=1 // pred_check_branch
      %490 = sbr.rel (0) target = $region65
    $region64: #{a_call__.1} parent=1 // pred_region
      %491 = dma.done [#allocation4], 128
    $region65: #{a_call__.1} parent=1 // pred_fallthru
      _
    // Predicated region
    $region66: #{a_call__.1} parent=1 // pred_check
      _
    $region67: #{a_call__.1} parent=1 // pred_check_branch
      %493 = sbr.rel (0) target = $region69
    $region68: #{a_call__.1} parent=1 // pred_region
      %494 = dma.done [#allocation12], 128
    $region69: #{a_call__.1} parent=1 // pred_fallthru
      _
    %495 = vsyncpa [#allocation3], 1
    %496 = vsyncpa [#allocation6], 1
    %497 = vsyncpa [#allocation9], 1
    %498 = vsyncpa [#allocation4], 1
    %499 = vsyncpa [#allocation12], 1

</llo_original>
